<compile_context>
chip_gen: v7x
topology: tpu7x:2x2x1
jax: 0.10.0
libtpu: 0.0.40
codegen_flags: <defaults>
</compile_context>

<pallas_src>
import functools

import jax
import jax.numpy as jnp
from jax.experimental import pallas as pl
from jax.experimental.pallas import tpu as pltpu

_LANES = 128           # TPU lane width; minor dim of every block
_GROUP = 64            # rows per trig group; one group = _GROUP*_LANES = 8192 steps
_MAX_ROWS_PER_BLOCK = 2048   # (3, 2048, 128) f32 block = 3 MiB


def _round_up(x: int, m: int) -> int:
    return ((x + m - 1) // m) * m


def _rows_per_block(num_rows: int, max_rows: int) -> int:
    """Rows per output block: a multiple of _GROUP, ~<= max_rows, low padding."""
    max_rows = max(int(max_rows), _GROUP)
    n_blocks = -(-num_rows // max_rows)
    return _round_up(-(-num_rows // n_blocks), _GROUP)


def sine_kernel(a_ref, gsin_ref, gcos_ref, ssin_ref, scos_ref, o_ref):
    """Writes one (3, rows_per_block, 128) tile of  a + sin(b*t + c).

    a_ref    : (3,)          f32  SMEM   per-channel offset a
    gsin_ref : (3, n_groups) f32  SMEM   sin(b * 8192 * g) for every global group
    gcos_ref : (3, n_groups) f32  SMEM   cos(b * 8192 * g)
    ssin_ref : (3, 64, 128)  f32  VMEM   sin(b * s + c), s = step within a group
    scos_ref : (3, 64, 128)  f32  VMEM   cos(b * s + c)
    o_ref    : (3, rpb, 128) f32  VMEM   output; time t = 128*global_row + lane
    """
    j = pl.program_id(0)
    group = ssin_ref.shape[1]               # rows per group (static, = 64)
    lanes = o_ref.shape[2]
    n_grp_tile = o_ref.shape[1] // group    # groups in this tile (static, <= 32)
    g0 = j * n_grp_tile                     # global index of this tile's 1st group

    for ch in range(3):                     # unrolled; tables shared across tiles
        s0 = ssin_ref[ch]                   # (group, 128) seed sin
        c0 = scos_ref[ch]                   # (group, 128) seed cos
        # Hoist the scalar->vreg splat of `a` out of the group loop.
        a_vec = jnp.full((group, lanes), a_ref[ch], dtype=jnp.float32)
        for g in range(n_grp_tile):         # unrolled; static store offsets
            sg = gsin_ref[ch, g0 + g]       # scalar SMEM reads (dynamic index)
            cg = gcos_ref[ch, g0 + g]
            # sin(theta_seed + theta_group) = s0*cg + c0*sg ; add a.
            o_ref[ch, g * group:(g + 1) * group, :] = a_vec + (s0 * cg + c0 * sg)


@functools.partial(
    jax.jit,
    static_argnames=("T", "channels_first", "max_rows_per_block", "core_parallel"))
def sine_estimator_forward(a, b, c, *, T: int, channels_first: bool = False,
                           max_rows_per_block: int = _MAX_ROWS_PER_BLOCK,
                           core_parallel: bool = False):
    """a, b, c: (3, 1) float32 parameters; T: sequence length (module's `len`).

    Returns (T, 3) float32 matching SineEstimator.forward().  Pass
    channels_first=True to get the lane-dense (3, T) result and skip the final
    transpose pass.  Pass core_parallel=True on multi-TensorCore chips (v7x)
    to shard the time-chunk grid axis across cores.
    """
    a = jnp.asarray(a, jnp.float32).reshape(3)
    b = jnp.asarray(b, jnp.float32).reshape(3)
    c = jnp.asarray(c, jnp.float32).reshape(3)

    num_rows = -(-T // _LANES)                       # 128-wide rows of the time axis
    rpb = _rows_per_block(num_rows, max_rows_per_block)
    grid_n = -(-num_rows // rpb)
    rows_pad = grid_n * rpb
    n_groups = rows_pad // _GROUP

    # Tiny tile-invariant trig tables (O(T/8192 + 8192) elements), built by XLA.
    #   t = 8192*g + s  =>  b*t + c = [b*8192*g] + [b*s + c]
    s_idx = jnp.arange(_GROUP * _LANES, dtype=jnp.float32).reshape(_GROUP, _LANES)
    theta_seed = b[:, None, None] * s_idx[None] + c[:, None, None]   # (3, 64, 128)
    seed_sin = jnp.sin(theta_seed)
    seed_cos = jnp.cos(theta_seed)
    g_step = jnp.arange(n_groups, dtype=jnp.float32) * float(_GROUP * _LANES)
    theta_grp = b[:, None] * g_step[None, :]                         # (3, n_groups)
    grp_sin = jnp.sin(theta_grp)
    grp_cos = jnp.cos(theta_grp)

    sem = pltpu.CORE_PARALLEL if core_parallel else pltpu.PARALLEL

    out3d = pl.pallas_call(
        sine_kernel,
        out_shape=jax.ShapeDtypeStruct((3, rows_pad, _LANES), jnp.float32),
        grid=(grid_n,),
        in_specs=[
            pl.BlockSpec(memory_space=pltpu.MemorySpace.SMEM),           # a (3,)
            pl.BlockSpec(memory_space=pltpu.MemorySpace.SMEM),           # grp_sin
            pl.BlockSpec(memory_space=pltpu.MemorySpace.SMEM),           # grp_cos
            pl.BlockSpec((3, _GROUP, _LANES), lambda j: (0, 0, 0)),      # seed_sin
            pl.BlockSpec((3, _GROUP, _LANES), lambda j: (0, 0, 0)),      # seed_cos
        ],
        out_specs=pl.BlockSpec((3, rpb, _LANES), lambda j: (0, j, 0)),
        compiler_params=pltpu.CompilerParams(dimension_semantics=(sem,)),
        cost_estimate=pl.CostEstimate(
            flops=4 * 3 * rows_pad * _LANES,
            transcendentals=0,
            bytes_accessed=4 * (3 * rows_pad * _LANES          # write-only output
                                + 2 * 3 * _GROUP * _LANES      # seed tables
                                + 2 * 3 * n_groups + 3)),      # SMEM tables + a
    )(a, grp_sin, grp_cos, seed_sin, seed_cos)

    # Fold the (rows_pad, 128) time tiling back to a flat axis and drop padding.
    out_ct = out3d.reshape(3, rows_pad * _LANES)[:, :T]        # (3, T), lane-dense
    if channels_first:
        return out_ct
    # Module layout (len, 3); one extra XLA pass over 12*T bytes -- prefer
    # channels_first=True when the consumer can take (3, T).
    return out_ct.T


if __name__ == "__main__":
    key = jax.random.PRNGKey(0)

    # ts is only used for its shape in SineEstimator.__init__: (len, vars).
    T, V = 16, 3
    ts = jax.random.normal(key, (T, V), dtype=jnp.float32)  # values unused
    assert ts.shape[1] == 3, "forward()'s broadcast requires vars == 3"

    # Deterministic parameter init, exactly as in SineEstimator.__init__:
    a = jnp.ones((3, 1), dtype=jnp.float32)
    b = jnp.array([[0.2], [0.3], [0.1]], dtype=jnp.float32)
    c = jnp.ones((3, 1), dtype=jnp.float32)

    def reference(length):
        # Pure-JAX mirror of the PyTorch forward().
        x = jnp.broadcast_to(
            jnp.arange(length, dtype=jnp.float32)[None, None, :], (1, 3, length))
        return (a[None] + jnp.sin(b[None] * x + c[None])).swapaxes(-1, -2)[0]

    # 1) Exact module size (T = 16): single tile, group 0 only -> matches the
    #    plain-f32 evaluation essentially bitwise.
    out_small = sine_estimator_forward(a, b, c, T=T)
    jax.block_until_ready(out_small)
    assert out_small.shape == (T, 3)
    assert jnp.allclose(out_small, reference(T), atol=1e-5), "small-T mismatch"

    # 2) Non-128-aligned T exercising the pad/slice path (still one tile).
    T2 = 1155
    out_big = sine_estimator_forward(a, b, c, T=T2)
    jax.block_until_ready(out_big)
    assert out_big.shape == (T2, 3)
    assert jnp.allclose(out_big, reference(T2), atol=5e-4), "mid-T mismatch"

    # Channels-first path (lane-dense, no transpose) agrees exactly.
    out_cf = sine_estimator_forward(a, b, c, T=T2, channels_first=True)
    jax.block_until_ready(out_cf)
    assert jnp.allclose(out_cf.T, out_big, atol=1e-6)

    # 3) Multi-tile + multi-group path (grid=2, 2 groups/tile) via a reduced
    #    block cap.  At |phase| ~ 5e3 the f32 rounding of the phase itself
    #    dominates the difference between the kernel's split evaluation and
    #    the reference's single-product evaluation, hence the loose tolerance
    #    (structural/indexing bugs would show up as O(1) errors).
    T3 = 17000
    out_mt = sine_estimator_forward(a, b, c, T=T3, max_rows_per_block=128)
    jax.block_until_ready(out_mt)
    assert out_mt.shape == (T3, 3)
    assert jnp.allclose(out_mt, reference(T3), atol=1e-2), "multi-tile mismatch"

    print("KERNEL_OK")
</pallas_src>

<mosaic_0001>
module attributes {stable_mosaic.version = 11 : i64} {
  func.func @sine_kernel(%arg0: i32, %arg1: memref<3xf32, #tpu.memory_space<smem>>, %arg2: memref<3x1xf32, #tpu.memory_space<smem>>, %arg3: memref<3x1xf32, #tpu.memory_space<smem>>, %arg4: memref<3x64x128xf32, #tpu.memory_space<vmem>>, %arg5: memref<3x64x128xf32, #tpu.memory_space<vmem>>, %arg6: memref<3x64x128xf32, #tpu.memory_space<vmem>>) attributes {dimension_semantics = [#tpu.dimension_semantics<parallel>], iteration_bounds = array<i64: 1>, scalar_prefetch = 0 : i64, scratch_operands = 0 : i64, tpu.core_type = #tpu.core_type<tc>, window_params = [{transform_indices = @transform_0, window_bounds = array<i64: 3>}, {transform_indices = @transform_1, window_bounds = array<i64: 3, 1>}, {transform_indices = @transform_2, window_bounds = array<i64: 3, 1>}, {pipeline_mode = #tpu.pipeline_mode<synchronous>, transform_indices = @transform_3, window_bounds = array<i64: 3, 64, 128>}, {pipeline_mode = #tpu.pipeline_mode<synchronous>, transform_indices = @transform_4, window_bounds = array<i64: 3, 64, 128>}, {transform_indices = @transform_5, window_bounds = array<i64: 3, 64, 128>}]} {
    %c1_i32 = arith.constant 1 : i32
    %0 = arith.muli %arg0, %c1_i32 : i32
    %c0 = arith.constant 0 : index
    %c0_0 = arith.constant 0 : index
    %c0_1 = arith.constant 0 : index
    %1 = vector.load %arg4[%c0, %c0_0, %c0_1] : memref<3x64x128xf32, #tpu.memory_space<vmem>>, vector<1x64x128xf32>
    %2 = vector.shape_cast %1 : vector<1x64x128xf32> to vector<64x128xf32>
    %c0_2 = arith.constant 0 : index
    %c0_3 = arith.constant 0 : index
    %c0_4 = arith.constant 0 : index
    %3 = vector.load %arg5[%c0_2, %c0_3, %c0_4] : memref<3x64x128xf32, #tpu.memory_space<vmem>>, vector<1x64x128xf32>
    %4 = vector.shape_cast %3 : vector<1x64x128xf32> to vector<64x128xf32>
    %c0_5 = arith.constant 0 : index
    %5 = memref.load %arg1[%c0_5] : memref<3xf32, #tpu.memory_space<smem>>
    %6 = vector.broadcast %5 : f32 to vector<64x128xf32>
    %c0_i32 = arith.constant 0 : i32
    %7 = arith.addi %0, %c0_i32 : i32
    %c0_6 = arith.constant 0 : index
    %8 = arith.index_cast %7 : i32 to index
    %9 = memref.load %arg2[%c0_6, %8] : memref<3x1xf32, #tpu.memory_space<smem>>
    %c0_i32_7 = arith.constant 0 : i32
    %10 = arith.addi %0, %c0_i32_7 : i32
    %c0_8 = arith.constant 0 : index
    %11 = arith.index_cast %10 : i32 to index
    %12 = memref.load %arg3[%c0_8, %11] : memref<3x1xf32, #tpu.memory_space<smem>>
    %13 = vector.broadcast %12 : f32 to vector<64x128xf32>
    %14 = arith.mulf %2, %13 : vector<64x128xf32>
    %15 = vector.broadcast %9 : f32 to vector<64x128xf32>
    %16 = arith.mulf %4, %15 : vector<64x128xf32>
    %17 = arith.addf %14, %16 : vector<64x128xf32>
    %18 = arith.addf %6, %17 : vector<64x128xf32>
    %c0_9 = arith.constant 0 : index
    %c0_10 = arith.constant 0 : index
    %c0_11 = arith.constant 0 : index
    %19 = vector.load %arg6[%c0_9, %c0_10, %c0_11] : memref<3x64x128xf32, #tpu.memory_space<vmem>>, vector<1x64x128xf32>
    %20 = vector.shape_cast %19 : vector<1x64x128xf32> to vector<64x128xf32>
    %21 = vector.shape_cast %18 : vector<64x128xf32> to vector<1x64x128xf32>
    tpu.vector_store %arg6[%c0_9, %c0_10, %c0_11], %21 {strides = array<i32>} : memref<3x64x128xf32, #tpu.memory_space<vmem>>, vector<1x64x128xf32>,
    %c1 = arith.constant 1 : index
    %c0_12 = arith.constant 0 : index
    %c0_13 = arith.constant 0 : index
    %22 = vector.load %arg4[%c1, %c0_12, %c0_13] : memref<3x64x128xf32, #tpu.memory_space<vmem>>, vector<1x64x128xf32>
    %23 = vector.shape_cast %22 : vector<1x64x128xf32> to vector<64x128xf32>
    %c1_14 = arith.constant 1 : index
    %c0_15 = arith.constant 0 : index
    %c0_16 = arith.constant 0 : index
    %24 = vector.load %arg5[%c1_14, %c0_15, %c0_16] : memref<3x64x128xf32, #tpu.memory_space<vmem>>, vector<1x64x128xf32>
    %25 = vector.shape_cast %24 : vector<1x64x128xf32> to vector<64x128xf32>
    %c1_17 = arith.constant 1 : index
    %26 = memref.load %arg1[%c1_17] : memref<3xf32, #tpu.memory_space<smem>>
    %27 = vector.broadcast %26 : f32 to vector<64x128xf32>
    %c0_i32_18 = arith.constant 0 : i32
    %28 = arith.addi %0, %c0_i32_18 : i32
    %c1_19 = arith.constant 1 : index
    %29 = arith.index_cast %28 : i32 to index
    %30 = memref.load %arg2[%c1_19, %29] : memref<3x1xf32, #tpu.memory_space<smem>>
    %c0_i32_20 = arith.constant 0 : i32
    %31 = arith.addi %0, %c0_i32_20 : i32
    %c1_21 = arith.constant 1 : index
    %32 = arith.index_cast %31 : i32 to index
    %33 = memref.load %arg3[%c1_21, %32] : memref<3x1xf32, #tpu.memory_space<smem>>
    %34 = vector.broadcast %33 : f32 to vector<64x128xf32>
    %35 = arith.mulf %23, %34 : vector<64x128xf32>
    %36 = vector.broadcast %30 : f32 to vector<64x128xf32>
    %37 = arith.mulf %25, %36 : vector<64x128xf32>
    %38 = arith.addf %35, %37 : vector<64x128xf32>
    %39 = arith.addf %27, %38 : vector<64x128xf32>
    %c1_22 = arith.constant 1 : index
    %c0_23 = arith.constant 0 : index
    %c0_24 = arith.constant 0 : index
    %40 = vector.load %arg6[%c1_22, %c0_23, %c0_24] : memref<3x64x128xf32, #tpu.memory_space<vmem>>, vector<1x64x128xf32>
    %41 = vector.shape_cast %40 : vector<1x64x128xf32> to vector<64x128xf32>
    %42 = vector.shape_cast %39 : vector<64x128xf32> to vector<1x64x128xf32>
    tpu.vector_store %arg6[%c1_22, %c0_23, %c0_24], %42 {strides = array<i32>} : memref<3x64x128xf32, #tpu.memory_space<vmem>>, vector<1x64x128xf32>,
    %c2 = arith.constant 2 : index
    %c0_25 = arith.constant 0 : index
    %c0_26 = arith.constant 0 : index
    %43 = vector.load %arg4[%c2, %c0_25, %c0_26] : memref<3x64x128xf32, #tpu.memory_space<vmem>>, vector<1x64x128xf32>
    %44 = vector.shape_cast %43 : vector<1x64x128xf32> to vector<64x128xf32>
    %c2_27 = arith.constant 2 : index
    %c0_28 = arith.constant 0 : index
    %c0_29 = arith.constant 0 : index
    %45 = vector.load %arg5[%c2_27, %c0_28, %c0_29] : memref<3x64x128xf32, #tpu.memory_space<vmem>>, vector<1x64x128xf32>
    %46 = vector.shape_cast %45 : vector<1x64x128xf32> to vector<64x128xf32>
    %c2_30 = arith.constant 2 : index
    %47 = memref.load %arg1[%c2_30] : memref<3xf32, #tpu.memory_space<smem>>
    %48 = vector.broadcast %47 : f32 to vector<64x128xf32>
    %c0_i32_31 = arith.constant 0 : i32
    %49 = arith.addi %0, %c0_i32_31 : i32
    %c2_32 = arith.constant 2 : index
    %50 = arith.index_cast %49 : i32 to index
    %51 = memref.load %arg2[%c2_32, %50] : memref<3x1xf32, #tpu.memory_space<smem>>
    %c0_i32_33 = arith.constant 0 : i32
    %52 = arith.addi %0, %c0_i32_33 : i32
    %c2_34 = arith.constant 2 : index
    %53 = arith.index_cast %52 : i32 to index
    %54 = memref.load %arg3[%c2_34, %53] : memref<3x1xf32, #tpu.memory_space<smem>>
    %55 = vector.broadcast %54 : f32 to vector<64x128xf32>
    %56 = arith.mulf %44, %55 : vector<64x128xf32>
    %57 = vector.broadcast %51 : f32 to vector<64x128xf32>
    %58 = arith.mulf %46, %57 : vector<64x128xf32>
    %59 = arith.addf %56, %58 : vector<64x128xf32>
    %60 = arith.addf %48, %59 : vector<64x128xf32>
    %c2_35 = arith.constant 2 : index
    %c0_36 = arith.constant 0 : index
    %c0_37 = arith.constant 0 : index
    %61 = vector.load %arg6[%c2_35, %c0_36, %c0_37] : memref<3x64x128xf32, #tpu.memory_space<vmem>>, vector<1x64x128xf32>
    %62 = vector.shape_cast %61 : vector<1x64x128xf32> to vector<64x128xf32>
    %63 = vector.shape_cast %60 : vector<64x128xf32> to vector<1x64x128xf32>
    tpu.vector_store %arg6[%c2_35, %c0_36, %c0_37], %63 {strides = array<i32>} : memref<3x64x128xf32, #tpu.memory_space<vmem>>, vector<1x64x128xf32>,
    return
  }
  func.func @transform_0(%arg0: i32) -> i32 {
    %c0_i32 = arith.constant 0 : i32
    %c0_i32_0 = arith.constant 0 : i32
    return %c0_i32 : i32
  }
  func.func @transform_1(%arg0: i32) -> (i32, i32) {
    %c0_i32 = arith.constant 0 : i32
    %c0_i32_0 = arith.constant 0 : i32
    %c0_i32_1 = arith.constant 0 : i32
    return %c0_i32, %c0_i32_0 : i32, i32
  }
  func.func @transform_2(%arg0: i32) -> (i32, i32) {
    %c0_i32 = arith.constant 0 : i32
    %c0_i32_0 = arith.constant 0 : i32
    %c0_i32_1 = arith.constant 0 : i32
    return %c0_i32, %c0_i32_0 : i32, i32
  }
  func.func @transform_3(%arg0: i32) -> (i32, i32, i32) {
    %c0_i32 = arith.constant 0 : i32
    %c0_i32_0 = arith.constant 0 : i32
    %c0_i32_1 = arith.constant 0 : i32
    %c0_i32_2 = arith.constant 0 : i32
    return %c0_i32, %c0_i32_0, %c0_i32_1 : i32, i32, i32
  }
  func.func @transform_4(%arg0: i32) -> (i32, i32, i32) {
    %c0_i32 = arith.constant 0 : i32
    %c0_i32_0 = arith.constant 0 : i32
    %c0_i32_1 = arith.constant 0 : i32
    %c0_i32_2 = arith.constant 0 : i32
    return %c0_i32, %c0_i32_0, %c0_i32_1 : i32, i32, i32
  }
  func.func @transform_5(%arg0: i32) -> (i32, i32, i32) {
    %c0_i32 = arith.constant 0 : i32
    %c0_i32_0 = arith.constant 0 : i32
    %c0_i32_1 = arith.constant 0 : i32
    return %c0_i32, %arg0, %c0_i32_0 : i32, i32, i32
  }
}

</mosaic_0001>

<llo_original>
// kernel: sine_estimator_forward.1
$region0: #{sine_estimator_forward.1}
  #allocation0 [shape = 'u32[]', space=smem, size = 0x4, offset = 0x4, fixed_abs, tag = 'smem constant byte address 0x4 - core index']
  #allocation1 [shape = 'u32[144,128]{1,0:T(1,128)}', space=vmem, size = 0x12000, scoped, tag = 'internal scratch']
  %s0 = inlined_call_operand.vmem [shape: f32[3], index: 0, kind: input, shape index: {}]
  %s1 = inlined_call_operand.vmem [shape: f32[3,1], index: 1, kind: input, shape index: {}]
  %s2 = inlined_call_operand.vmem [shape: f32[3,1], index: 2, kind: input, shape index: {}]
  %s3 = inlined_call_operand.vmem [shape: f32[3,64,128], index: 3, kind: input, shape index: {}]
  %s4 = inlined_call_operand.vmem [shape: f32[3,64,128], index: 4, kind: input, shape index: {}]
  %s5 = inlined_call_operand.vmem [shape: f32[3,64,128], index: 5, kind: output, shape index: {}]
  %s6 = sld [smem:[#allocation0]]
  $region42: #{sine_estimator_forward.1} parent=0
    _
  %s8 = ssub.s32 1, %s6
  %s9 = scalar_select 0, %s8, %s6
  $region1: #{sine_estimator_forward.1} parent=0
    #allocation2 [shape = 'u8[512]{0}', space=smem, size = 0x200, scoped, tag = 'input window, operand 0, single buffered']
    #allocation3 [shape = 's32[1]{0}', space=sflag, size = 0x4, scoped, tag = 'scoped memory for sine_estimator_forward.1']
    #allocation4 [shape = 'u8[2048]{0}', space=smem, size = 0x800, scoped, tag = 'input window, operand 1, single buffered']
    #allocation5 [shape = 's32[1]{0}', space=sflag, size = 0x4, scoped, tag = 'scoped memory for sine_estimator_forward.1']
    #allocation6 [shape = 'u8[2048]{0}', space=smem, size = 0x800, scoped, tag = 'input window, operand 2, single buffered']
    %10 = vsyncpa [#allocation3], 0
    %11 = vsyncpa [#allocation5], 0
    // Predicated region
    $region2: #{sine_estimator_forward.1} parent=1 // pred_check
      _
    $region3: #{sine_estimator_forward.1} parent=1 // pred_check_branch
      %13 = sbr.rel (0) target = $region5
    $region4: #{sine_estimator_forward.1} parent=1 // pred_region
      %s15 = ssub.s32 16, 16
      %16 = vsyncadd [#allocation3], %s15
      %s18 = sshll.u32 %s0, 4
      %s19 = int_to_ptr.vmem [resolvable:$true] %s18
      %21 = dma.vmem_to_smem %s19, 16, [#allocation2], [#allocation3]
    $region5: #{sine_estimator_forward.1} parent=1 // pred_fallthru
      _
    // Predicated region
    $region6: #{sine_estimator_forward.1} parent=1 // pred_check
      _
    $region7: #{sine_estimator_forward.1} parent=1 // pred_check_branch
      %23 = sbr.rel (0) target = $region9
    $region8: #{sine_estimator_forward.1} parent=1 // pred_region
      %s25 = ssub.s32 64, 64
      %26 = vsyncadd [#allocation5], %s25
      %s28 = sshll.u32 %s1, 4
      %s29 = int_to_ptr.vmem [resolvable:$true] %s28
      %31 = dma.vmem_to_smem %s29, 64, [#allocation4], [#allocation5]
    $region9: #{sine_estimator_forward.1} parent=1 // pred_fallthru
      _
    // Predicated region
    $region10: #{sine_estimator_forward.1} parent=1 // pred_check
      _
    $region11: #{sine_estimator_forward.1} parent=1 // pred_check_branch
      %33 = sbr.rel (0) target = $region13
    $region12: #{sine_estimator_forward.1} parent=1 // pred_region
      %s35 = ssub.s32 64, 64
      %36 = vsyncadd [#allocation5], %s35
      %s38 = sshll.u32 %s2, 4
      %s39 = int_to_ptr.vmem [resolvable:$true] %s38
      %41 = dma.vmem_to_smem %s39, 64, [#allocation6], [#allocation5]
    $region13: #{sine_estimator_forward.1} parent=1 // pred_fallthru
      _
    // Predicated region
    $region14: #{sine_estimator_forward.1} parent=1 // pred_check
      _
    $region15: #{sine_estimator_forward.1} parent=1 // pred_check_branch
      %43 = sbr.rel (0) target = $region17
    $region16: #{sine_estimator_forward.1} parent=1 // pred_region
      _
    $region17: #{sine_estimator_forward.1} parent=1 // pred_fallthru
      _
    // Predicated region
    $region18: #{sine_estimator_forward.1} parent=1 // pred_check
      _
    $region19: #{sine_estimator_forward.1} parent=1 // pred_check_branch
      %45 = sbr.rel (0) target = $region21
    $region20: #{sine_estimator_forward.1} parent=1 // pred_region
      _
    $region21: #{sine_estimator_forward.1} parent=1 // pred_fallthru
      _
    // Predicated region
    $region22: #{sine_estimator_forward.1} parent=1 // pred_check
      _
    $region23: #{sine_estimator_forward.1} parent=1 // pred_check_branch
      %47 = sbr.rel (0) target = $region25
    $region24: #{sine_estimator_forward.1} parent=1 // pred_region
      %48 = dma.done [#allocation3], 16
    $region25: #{sine_estimator_forward.1} parent=1 // pred_fallthru
      _
    // Predicated region
    $region26: #{sine_estimator_forward.1} parent=1 // pred_check
      _
    $region27: #{sine_estimator_forward.1} parent=1 // pred_check_branch
      %50 = sbr.rel (0) target = $region29
    $region28: #{sine_estimator_forward.1} parent=1 // pred_region
      %51 = dma.done [#allocation5], 64
    $region29: #{sine_estimator_forward.1} parent=1 // pred_fallthru
      _
    // Predicated region
    $region30: #{sine_estimator_forward.1} parent=1 // pred_check
      _
    $region31: #{sine_estimator_forward.1} parent=1 // pred_check_branch
      %53 = sbr.rel (0) target = $region33
    $region32: #{sine_estimator_forward.1} parent=1 // pred_region
      %54 = dma.done [#allocation5], 64
    $region33: #{sine_estimator_forward.1} parent=1 // pred_fallthru
      _
    %55 = sfence
    %v56 = vld [vmem:[%s3] sm:$0xff]
    %v57 = vld [vmem:[%s3 + $0x8] sm:$0xff]
    %v58 = vld [vmem:[%s3 + $0x10] sm:$0xff]
    %v59 = vld [vmem:[%s3 + $0x18] sm:$0xff]
    %v60 = vld [vmem:[%s3 + $0x20] sm:$0xff]
    %v61 = vld [vmem:[%s3 + $0x28] sm:$0xff]
    %v62 = vld [vmem:[%s3 + $0x30] sm:$0xff]
    %v63 = vld [vmem:[%s3 + $0x38] sm:$0xff]
    %v64 = vld [vmem:[%s4] sm:$0xff]
    %v65 = vld [vmem:[%s4 + $0x8] sm:$0xff]
    %v66 = vld [vmem:[%s4 + $0x10] sm:$0xff]
    %v67 = vld [vmem:[%s4 + $0x18] sm:$0xff]
    %v68 = vld [vmem:[%s4 + $0x20] sm:$0xff]
    %v69 = vld [vmem:[%s4 + $0x28] sm:$0xff]
    %v70 = vld [vmem:[%s4 + $0x30] sm:$0xff]
    %v71 = vld [vmem:[%s4 + $0x38] sm:$0xff]
    %s72 = sld [smem:[#allocation2]]
    %v73 = vstv %s72
    %s74 = sld [smem:[#allocation4]]
    %s75 = sld [smem:[#allocation6]]
    %v76 = vstv %s75
    %v77 = vmul.f32 %v56, %v76
    %v78 = vmul.f32 %v57, %v76
    %v79 = vmul.f32 %v58, %v76
    %v80 = vmul.f32 %v59, %v76
    %v81 = vmul.f32 %v60, %v76
    %v82 = vmul.f32 %v61, %v76
    %v83 = vmul.f32 %v62, %v76
    %v84 = vmul.f32 %v63, %v76
    %v85 = vstv %s74
    %v86 = vmul.f32 %v64, %v85
    %v87 = vmul.f32 %v65, %v85
    %v88 = vmul.f32 %v66, %v85
    %v89 = vmul.f32 %v67, %v85
    %v90 = vmul.f32 %v68, %v85
    %v91 = vmul.f32 %v69, %v85
    %v92 = vmul.f32 %v70, %v85
    %v93 = vmul.f32 %v71, %v85
    %v94 = vadd.f32 %v77, %v86
    %v95 = vadd.f32 %v78, %v87
    %v96 = vadd.f32 %v79, %v88
    %v97 = vadd.f32 %v80, %v89
    %v98 = vadd.f32 %v81, %v90
    %v99 = vadd.f32 %v82, %v91
    %v100 = vadd.f32 %v83, %v92
    %v101 = vadd.f32 %v84, %v93
    %v102 = vadd.f32 %v73, %v94
    %v103 = vadd.f32 %v73, %v95
    %v104 = vadd.f32 %v73, %v96
    %v105 = vadd.f32 %v73, %v97
    %v106 = vadd.f32 %v73, %v98
    %v107 = vadd.f32 %v73, %v99
    %v108 = vadd.f32 %v73, %v100
    %v109 = vadd.f32 %v73, %v101
    %110 = vst [vmem:[%s5] sm:$0xff] %v102
    %111 = vst [vmem:[%s5 + $0x8] sm:$0xff] %v103
    %112 = vst [vmem:[%s5 + $0x10] sm:$0xff] %v104
    %113 = vst [vmem:[%s5 + $0x18] sm:$0xff] %v105
    %114 = vst [vmem:[%s5 + $0x20] sm:$0xff] %v106
    %115 = vst [vmem:[%s5 + $0x28] sm:$0xff] %v107
    %116 = vst [vmem:[%s5 + $0x30] sm:$0xff] %v108
    %117 = vst [vmem:[%s5 + $0x38] sm:$0xff] %v109
    %s118 = scalar_lea.vmem %s3, 64
    %v119 = vld [vmem:[%s118] sm:$0xff]
    %v120 = vld [vmem:[%s118 + $0x8] sm:$0xff]
    %v121 = vld [vmem:[%s118 + $0x10] sm:$0xff]
    %v122 = vld [vmem:[%s118 + $0x18] sm:$0xff]
    %v123 = vld [vmem:[%s118 + $0x20] sm:$0xff]
    %v124 = vld [vmem:[%s118 + $0x28] sm:$0xff]
    %v125 = vld [vmem:[%s118 + $0x30] sm:$0xff]
    %v126 = vld [vmem:[%s118 + $0x38] sm:$0xff]
    %s127 = scalar_lea.vmem %s4, 64
    %v128 = vld [vmem:[%s127] sm:$0xff]
    %v129 = vld [vmem:[%s127 + $0x8] sm:$0xff]
    %v130 = vld [vmem:[%s127 + $0x10] sm:$0xff]
    %v131 = vld [vmem:[%s127 + $0x18] sm:$0xff]
    %v132 = vld [vmem:[%s127 + $0x20] sm:$0xff]
    %v133 = vld [vmem:[%s127 + $0x28] sm:$0xff]
    %v134 = vld [vmem:[%s127 + $0x30] sm:$0xff]
    %v135 = vld [vmem:[%s127 + $0x38] sm:$0xff]
    %s136 = sld [smem:[#allocation2 + $0x1]]
    %v137 = vstv %s136
    %s138 = sadd.s32 0, 1
    %s139 = smul.u32 %s138, 128
    %s140 = sadd.s32 %s139, 0
    %s141 = sld [smem:[#allocation4 + %s140]]
    %s142 = sld [smem:[#allocation6 + %s140]]
    %v143 = vstv %s142
    %v144 = vmul.f32 %v119, %v143
    %v145 = vmul.f32 %v120, %v143
    %v146 = vmul.f32 %v121, %v143
    %v147 = vmul.f32 %v122, %v143
    %v148 = vmul.f32 %v123, %v143
    %v149 = vmul.f32 %v124, %v143
    %v150 = vmul.f32 %v125, %v143
    %v151 = vmul.f32 %v126, %v143
    %v152 = vstv %s141
    %v153 = vmul.f32 %v128, %v152
    %v154 = vmul.f32 %v129, %v152
    %v155 = vmul.f32 %v130, %v152
    %v156 = vmul.f32 %v131, %v152
    %v157 = vmul.f32 %v132, %v152
    %v158 = vmul.f32 %v133, %v152
    %v159 = vmul.f32 %v134, %v152
    %v160 = vmul.f32 %v135, %v152
    %v161 = vadd.f32 %v144, %v153
    %v162 = vadd.f32 %v145, %v154
    %v163 = vadd.f32 %v146, %v155
    %v164 = vadd.f32 %v147, %v156
    %v165 = vadd.f32 %v148, %v157
    %v166 = vadd.f32 %v149, %v158
    %v167 = vadd.f32 %v150, %v159
    %v168 = vadd.f32 %v151, %v160
    %v169 = vadd.f32 %v137, %v161
    %v170 = vadd.f32 %v137, %v162
    %v171 = vadd.f32 %v137, %v163
    %v172 = vadd.f32 %v137, %v164
    %v173 = vadd.f32 %v137, %v165
    %v174 = vadd.f32 %v137, %v166
    %v175 = vadd.f32 %v137, %v167
    %v176 = vadd.f32 %v137, %v168
    %s177 = scalar_lea.vmem %s5, 64
    %178 = vst [vmem:[%s177] sm:$0xff] %v169
    %179 = vst [vmem:[%s177 + $0x8] sm:$0xff] %v170
    %180 = vst [vmem:[%s177 + $0x10] sm:$0xff] %v171
    %181 = vst [vmem:[%s177 + $0x18] sm:$0xff] %v172
    %182 = vst [vmem:[%s177 + $0x20] sm:$0xff] %v173
    %183 = vst [vmem:[%s177 + $0x28] sm:$0xff] %v174
    %184 = vst [vmem:[%s177 + $0x30] sm:$0xff] %v175
    %185 = vst [vmem:[%s177 + $0x38] sm:$0xff] %v176
    %s186 = scalar_lea.vmem %s3, 128
    %v187 = vld [vmem:[%s186] sm:$0xff]
    %v188 = vld [vmem:[%s186 + $0x8] sm:$0xff]
    %v189 = vld [vmem:[%s186 + $0x10] sm:$0xff]
    %v190 = vld [vmem:[%s186 + $0x18] sm:$0xff]
    %v191 = vld [vmem:[%s186 + $0x20] sm:$0xff]
    %v192 = vld [vmem:[%s186 + $0x28] sm:$0xff]
    %v193 = vld [vmem:[%s186 + $0x30] sm:$0xff]
    %v194 = vld [vmem:[%s186 + $0x38] sm:$0xff]
    %s195 = scalar_lea.vmem %s4, 128
    %v196 = vld [vmem:[%s195] sm:$0xff]
    %v197 = vld [vmem:[%s195 + $0x8] sm:$0xff]
    %v198 = vld [vmem:[%s195 + $0x10] sm:$0xff]
    %v199 = vld [vmem:[%s195 + $0x18] sm:$0xff]
    %v200 = vld [vmem:[%s195 + $0x20] sm:$0xff]
    %v201 = vld [vmem:[%s195 + $0x28] sm:$0xff]
    %v202 = vld [vmem:[%s195 + $0x30] sm:$0xff]
    %v203 = vld [vmem:[%s195 + $0x38] sm:$0xff]
    %s204 = sld [smem:[#allocation2 + $0x2]]
    %v205 = vstv %s204
    %s206 = sadd.s32 0, 2
    %s207 = smul.u32 %s206, 128
    %s208 = sadd.s32 %s207, 0
    %s209 = sld [smem:[#allocation4 + %s208]]
    %s210 = sld [smem:[#allocation6 + %s208]]
    %v211 = vstv %s210
    %v212 = vmul.f32 %v187, %v211
    %v213 = vmul.f32 %v188, %v211
    %v214 = vmul.f32 %v189, %v211
    %v215 = vmul.f32 %v190, %v211
    %v216 = vmul.f32 %v191, %v211
    %v217 = vmul.f32 %v192, %v211
    %v218 = vmul.f32 %v193, %v211
    %v219 = vmul.f32 %v194, %v211
    %v220 = vstv %s209
    %v221 = vmul.f32 %v196, %v220
    %v222 = vmul.f32 %v197, %v220
    %v223 = vmul.f32 %v198, %v220
    %v224 = vmul.f32 %v199, %v220
    %v225 = vmul.f32 %v200, %v220
    %v226 = vmul.f32 %v201, %v220
    %v227 = vmul.f32 %v202, %v220
    %v228 = vmul.f32 %v203, %v220
    %v229 = vadd.f32 %v212, %v221
    %v230 = vadd.f32 %v213, %v222
    %v231 = vadd.f32 %v214, %v223
    %v232 = vadd.f32 %v215, %v224
    %v233 = vadd.f32 %v216, %v225
    %v234 = vadd.f32 %v217, %v226
    %v235 = vadd.f32 %v218, %v227
    %v236 = vadd.f32 %v219, %v228
    %v237 = vadd.f32 %v205, %v229
    %v238 = vadd.f32 %v205, %v230
    %v239 = vadd.f32 %v205, %v231
    %v240 = vadd.f32 %v205, %v232
    %v241 = vadd.f32 %v205, %v233
    %v242 = vadd.f32 %v205, %v234
    %v243 = vadd.f32 %v205, %v235
    %v244 = vadd.f32 %v205, %v236
    %s245 = scalar_lea.vmem %s5, 128
    %246 = vst [vmem:[%s245] sm:$0xff] %v237
    %247 = vst [vmem:[%s245 + $0x8] sm:$0xff] %v238
    %248 = vst [vmem:[%s245 + $0x10] sm:$0xff] %v239
    %249 = vst [vmem:[%s245 + $0x18] sm:$0xff] %v240
    %250 = vst [vmem:[%s245 + $0x20] sm:$0xff] %v241
    %251 = vst [vmem:[%s245 + $0x28] sm:$0xff] %v242
    %252 = vst [vmem:[%s245 + $0x30] sm:$0xff] %v243
    %253 = vst [vmem:[%s245 + $0x38] sm:$0xff] %v244
    // Predicated region
    $region34: #{sine_estimator_forward.1} parent=1 // pred_check
      _
    $region35: #{sine_estimator_forward.1} parent=1 // pred_check_branch
      %255 = sbr.rel (0) target = $region37
    $region36: #{sine_estimator_forward.1} parent=1 // pred_region
      _
    $region37: #{sine_estimator_forward.1} parent=1 // pred_fallthru
      _
    // Predicated region
    $region38: #{sine_estimator_forward.1} parent=1 // pred_check
      _
    $region39: #{sine_estimator_forward.1} parent=1 // pred_check_branch
      %257 = sbr.rel (0) target = $region41
    $region40: #{sine_estimator_forward.1} parent=1 // pred_region
      _
    $region41: #{sine_estimator_forward.1} parent=1 // pred_fallthru
      _
    %258 = vsyncpa [#allocation3], 1
    %259 = vsyncpa [#allocation5], 1

</llo_original>
